<compile_context>
chip_gen: v7x
topology: tpu7x:2x2x1
jax: 0.10.0
libtpu: 0.0.40
codegen_flags: <defaults>
</compile_context>

<pallas_src>
import math

import jax
import jax.numpy as jnp
from jax.experimental import pallas as pl
from jax.experimental.pallas import tpu as pltpu


# ----------------------------------------------------------------------------
# Kernel
# ----------------------------------------------------------------------------
def _make_film_kernel(eps: float):
    def film_kernel(x_ref, gb_ref, o_ref):
        # x_ref: (Bt, TS, D)   gb_ref: (Bt, 2D) = [g' || b']   o_ref: (Bt, TS, D)
        x = x_ref[...].astype(jnp.float32)
        d = x.shape[-1]
        inv_d = jnp.float32(1.0 / d)

        gb = gb_ref[...].astype(jnp.float32)            # (Bt, 2D)
        g = gb[:, :d][:, None, :]                       # (Bt, 1, D)
        b = gb[:, d:][:, None, :]                       # (Bt, 1, D)

        # Two-pass LayerNorm statistics in f32 (matches PyTorch numerics).
        mean = jnp.sum(x, axis=-1, keepdims=True) * inv_d
        xc = x - mean
        var = jnp.sum(xc * xc, axis=-1, keepdims=True) * inv_d
        xn = xc * jax.lax.rsqrt(var + jnp.float32(eps))

        # FiLM modulate with LN-affine already folded into g'/b'.
        # (For bf16 I/O on v6e/v7x this FMA could run in bf16; kept f32 so it
        #  is also optimal/safe on v5e which has no bf16 VPU.)
        o_ref[...] = (g * xn + b).astype(o_ref.dtype)

    return film_kernel


# ----------------------------------------------------------------------------
# One-time parameter fusion (do this at init, not per forward call).
# ----------------------------------------------------------------------------
def fuse_film_params(wg, bg, wb, bb, ln_w, ln_b):
    """Fold LayerNorm affine + both Linears into one (d_t, 2D) projection."""
    w_fused = jnp.concatenate([wg * ln_w[None, :], wg * ln_b[None, :] + wb], axis=1)
    b_fused = jnp.concatenate([bg * ln_w, bg * ln_b + bb], axis=0)
    return w_fused, b_fused


# ----------------------------------------------------------------------------
# Tiling helpers
# ----------------------------------------------------------------------------
def _vmem_capacity_bytes() -> int:
    try:
        return int(pltpu.get_tpu_info().vmem_capacity_bytes)
    except Exception:
        return 64 * 1024 * 1024          # conservative fallback (v7x per-core)


def _choose_tiles(B, S, D, itemsize, target_bytes):
    """Pick (Bt, TS) so the x tile is ~target_bytes and layout friendly."""
    sublane = max(8, 32 // itemsize)              # 8 f32, 16 bf16, 32 int8/fp8
    row_bytes = max(D * itemsize, 1)
    per_batch = S * row_bytes

    # --- small-S path: block over the batch axis, keep the full sequence ---
    if B * per_batch <= target_bytes:
        return B, S
    if B >= 8 and 8 * per_batch <= target_bytes:
        bt = (target_bytes // per_batch) // 8 * 8      # 8-aligned sublane dim
        return min(bt, B), S
    if per_batch <= target_bytes:
        return 1, S

    # --- long-S path: one batch per step, tile the sequence axis ---
    rows = max(sublane, (target_bytes // row_bytes) // sublane * sublane)
    if rows >= S:
        return 1, S
    # Prefer an exact divisor of S, but never collapse below rows // 2 —
    # one ragged (masked) trailing block beats multiplying the grid steps.
    floor = max(sublane, (rows // 2) // sublane * sublane)
    ts = rows
    while ts >= floor:
        if S % ts == 0:
            return 1, ts
        ts -= sublane
    return 1, rows


# ----------------------------------------------------------------------------
# Forward wrapper
# ----------------------------------------------------------------------------
def film_forward(x, t, w_fused, b_fused, *, eps=1e-6):
    """x: (B, S, D); t: (B, d_t); w_fused: (d_t, 2D); b_fused: (2D,)."""
    B, S, D = x.shape
    itemsize = jnp.dtype(x.dtype).itemsize

    # Hoisted gamma/beta projection: one well-shaped MXU matmul producing the
    # LN-folded coefficients as a single lane-dense (B, 2D) operand.
    gb = (jnp.dot(t, w_fused, preferred_element_type=jnp.float32)
          + b_fused).astype(jnp.float32)

    vmem_cap = _vmem_capacity_bytes()
    target = int(min(6 << 20, max(2 << 20, vmem_cap // 12)))
    Bt, TS = _choose_tiles(B, S, D, itemsize, target)

    tile_bytes = Bt * TS * D * itemsize
    f32_tile = Bt * TS * D * 4
    # double-buffered in + out (x dtype) + ~2 live f32 working copies + slack
    vmem_limit = 4 * tile_bytes + 2 * f32_tile + (8 << 20)
    vmem_limit = int(min(max(vmem_limit, 32 << 20), vmem_cap * 3 // 4))

    grid = (pl.cdiv(B, Bt), pl.cdiv(S, TS))

    return pl.pallas_call(
        _make_film_kernel(eps),
        out_shape=jax.ShapeDtypeStruct((B, S, D), x.dtype),
        grid_spec=pltpu.PrefetchScalarGridSpec(
            num_scalar_prefetch=0,
            grid=grid,
            in_specs=[
                pl.BlockSpec((Bt, TS, D), lambda bi, si: (bi, si, 0)),   # x
                pl.BlockSpec((Bt, 2 * D), lambda bi, si: (bi, 0)),       # [g'||b']
            ],
            out_specs=pl.BlockSpec((Bt, TS, D), lambda bi, si: (bi, si, 0)),
        ),
        compiler_params=pltpu.CompilerParams(
            dimension_semantics=("parallel", "parallel"),
            vmem_limit_bytes=vmem_limit),
    )(x, gb)


# ----------------------------------------------------------------------------
# Pure-JAX reference (mirrors the PyTorch module exactly)
# ----------------------------------------------------------------------------
def film_reference(x, t, wg, bg, wb, bb, ln_w, ln_b, *, eps=1e-6):
    g = (t @ wg + bg)[:, None, :]
    b = (t @ wb + bb)[:, None, :]
    mean = jnp.mean(x, axis=-1, keepdims=True)
    var = jnp.mean(jnp.square(x - mean), axis=-1, keepdims=True)
    xn = (x - mean) / jnp.sqrt(var + eps)
    xn = xn * ln_w + ln_b
    return g * xn + b


if __name__ == "__main__":
    # Small shapes implied by the forward: x (B, S, d_model), t (B, d_t)
    B, S, d_model, d_t = 2, 8, 32, 16
    eps = 1e-6

    key = jax.random.PRNGKey(0)
    kx, kt, kwg, kbg, kwb, kbb = jax.random.split(key, 6)

    x = jax.random.normal(kx, (B, S, d_model), dtype=jnp.float32)
    t = jax.random.normal(kt, (B, d_t), dtype=jnp.float32)

    # PyTorch nn.Linear-style init: U(-1/sqrt(d_t), 1/sqrt(d_t))
    bound = 1.0 / math.sqrt(d_t)
    wg = jax.random.uniform(kwg, (d_t, d_model), minval=-bound, maxval=bound,
                            dtype=jnp.float32)
    bg = jax.random.uniform(kbg, (d_model,), minval=-bound, maxval=bound,
                            dtype=jnp.float32)
    wb = jax.random.uniform(kwb, (d_t, d_model), minval=-bound, maxval=bound,
                            dtype=jnp.float32)
    bb = jax.random.uniform(kbb, (d_model,), minval=-bound, maxval=bound,
                            dtype=jnp.float32)
    # LayerNorm affine: weight=1, bias=0 (PyTorch default)
    ln_w = jnp.ones((d_model,), dtype=jnp.float32)
    ln_b = jnp.zeros((d_model,), dtype=jnp.float32)

    # One-time parameter fusion (amortized over all forward calls).
    w_fused, b_fused = fuse_film_params(wg, bg, wb, bb, ln_w, ln_b)

    out = film_forward(x, t, w_fused, b_fused, eps=eps)
    out = jax.block_until_ready(out)

    ref = film_reference(x, t, wg, bg, wb, bb, ln_w, ln_b, eps=eps)
    assert out.shape == (B, S, d_model)
    assert jnp.allclose(out, ref, atol=1e-5, rtol=1e-5)

    print("KERNEL_OK")
</pallas_src>

<mosaic_0001>
module attributes {stable_mosaic.version = 11 : i64} {
  func.func @film_kernel(%arg0: i32, %arg1: i32, %arg2: memref<2x8x32xf32, #tpu.memory_space<vmem>>, %arg3: memref<2x64xf32, #tpu.memory_space<vmem>>, %arg4: memref<2x8x32xf32, #tpu.memory_space<vmem>>) attributes {dimension_semantics = [#tpu.dimension_semantics<parallel>, #tpu.dimension_semantics<parallel>], iteration_bounds = array<i64: 1, 1>, scalar_prefetch = 0 : i64, scratch_operands = 0 : i64, tpu.core_type = #tpu.core_type<tc>, window_params = [{transform_indices = @transform_0, window_bounds = array<i64: 2, 8, 32>}, {transform_indices = @transform_1, window_bounds = array<i64: 2, 64>}, {transform_indices = @transform_2, window_bounds = array<i64: 2, 8, 32>}]} {
    %c0 = arith.constant 0 : index
    %c0_0 = arith.constant 0 : index
    %c0_1 = arith.constant 0 : index
    %0 = vector.load %arg2[%c0, %c0_0, %c0_1] : memref<2x8x32xf32, #tpu.memory_space<vmem>>, vector<2x8x32xf32>
    %c0_2 = arith.constant 0 : index
    %c0_3 = arith.constant 0 : index
    %1 = vector.load %arg3[%c0_2, %c0_3] : memref<2x64xf32, #tpu.memory_space<vmem>>, vector<2x64xf32>
    %2 = vector.extract_strided_slice %1 {offsets = [0, 0], sizes = [2, 32], strides = [1, 1]} : vector<2x64xf32> to vector<2x32xf32>
    %3 = vector.shape_cast %2 : vector<2x32xf32> to vector<2x1x32xf32>
    %4 = vector.extract_strided_slice %1 {offsets = [0, 32], sizes = [2, 32], strides = [1, 1]} : vector<2x64xf32> to vector<2x32xf32>
    %5 = vector.shape_cast %4 : vector<2x32xf32> to vector<2x1x32xf32>
    %cst = arith.constant dense<0.000000e+00> : vector<2x8xf32>
    %6 = vector.multi_reduction <add>, %0, %cst [2] : vector<2x8x32xf32> to vector<2x8xf32>
    %7 = vector.shape_cast %6 : vector<2x8xf32> to vector<2x8x1xf32>
    %cst_4 = arith.constant 3.125000e-02 : f32
    %8 = vector.broadcast %cst_4 : f32 to vector<2x8x1xf32>
    %9 = arith.mulf %7, %8 : vector<2x8x1xf32>
    %10 = vector.broadcast %9 : vector<2x8x1xf32> to vector<2x8x32xf32>
    %11 = arith.subf %0, %10 : vector<2x8x32xf32>
    %12 = arith.mulf %11, %11 : vector<2x8x32xf32>
    %cst_5 = arith.constant dense<0.000000e+00> : vector<2x8xf32>
    %13 = vector.multi_reduction <add>, %12, %cst_5 [2] : vector<2x8x32xf32> to vector<2x8xf32>
    %14 = vector.shape_cast %13 : vector<2x8xf32> to vector<2x8x1xf32>
    %cst_6 = arith.constant 3.125000e-02 : f32
    %15 = vector.broadcast %cst_6 : f32 to vector<2x8x1xf32>
    %16 = arith.mulf %14, %15 : vector<2x8x1xf32>
    %cst_7 = arith.constant 9.99999997E-7 : f32
    %17 = vector.broadcast %cst_7 : f32 to vector<2x8x1xf32>
    %18 = arith.addf %16, %17 : vector<2x8x1xf32>
    %19 = math.rsqrt %18 : vector<2x8x1xf32>
    %20 = vector.broadcast %19 : vector<2x8x1xf32> to vector<2x8x32xf32>
    %21 = arith.mulf %11, %20 : vector<2x8x32xf32>
    %22 = vector.broadcast %3 : vector<2x1x32xf32> to vector<2x8x32xf32>
    %23 = arith.mulf %22, %21 : vector<2x8x32xf32>
    %24 = vector.broadcast %5 : vector<2x1x32xf32> to vector<2x8x32xf32>
    %25 = arith.addf %23, %24 : vector<2x8x32xf32>
    %c0_8 = arith.constant 0 : index
    %c0_9 = arith.constant 0 : index
    %c0_10 = arith.constant 0 : index
    %26 = vector.load %arg4[%c0_8, %c0_9, %c0_10] : memref<2x8x32xf32, #tpu.memory_space<vmem>>, vector<2x8x32xf32>
    tpu.vector_store %arg4[%c0_8, %c0_9, %c0_10], %25 {strides = array<i32>} : memref<2x8x32xf32, #tpu.memory_space<vmem>>, vector<2x8x32xf32>,
    return
  }
  func.func @transform_0(%arg0: i32, %arg1: i32) -> (i32, i32, i32) {
    %c0_i32 = arith.constant 0 : i32
    %c0_i32_0 = arith.constant 0 : i32
    return %arg0, %arg1, %c0_i32 : i32, i32, i32
  }
  func.func @transform_1(%arg0: i32, %arg1: i32) -> (i32, i32) {
    %c0_i32 = arith.constant 0 : i32
    %c0_i32_0 = arith.constant 0 : i32
    return %arg0, %c0_i32 : i32, i32
  }
  func.func @transform_2(%arg0: i32, %arg1: i32) -> (i32, i32, i32) {
    %c0_i32 = arith.constant 0 : i32
    %c0_i32_0 = arith.constant 0 : i32
    return %arg0, %arg1, %c0_i32 : i32, i32, i32
  }
}

</mosaic_0001>

<llo_original>
// kernel: tpu_custom_call.1
$region0: #{tpu_custom_call.1}
  #allocation0 [shape = 'u32[]', space=smem, size = 0x4, offset = 0x4, fixed_abs, tag = 'smem constant byte address 0x4 - core index']
  #allocation1 [shape = 'u32[144,128]{1,0:T(1,128)}', space=vmem, size = 0x12000, scoped, tag = 'internal scratch']
  %s0 = inlined_call_operand.hbm [shape: f32[2,8,32], index: 0, kind: input, shape index: {}]
  %s1 = inlined_call_operand.vmem [shape: f32[2,64], index: 1, kind: input, shape index: {}]
  %s2 = inlined_call_operand.hbm [shape: f32[2,8,32], index: 2, kind: output, shape index: {}]
  %s3 = sld [smem:[#allocation0]]
  $region22: #{tpu_custom_call.1} parent=0
    _
  %s5 = ssub.s32 1, %s3
  %s6 = scalar_select 0, %s5, %s3
  $region1: #{tpu_custom_call.1} parent=0
    #allocation2 [shape = 'u8[8192]{0}', space=vmem, size = 0x2000, scoped, tag = 'input window, operand 0, single buffered']
    #allocation3 [shape = 's32[1]{0}', space=sflag, size = 0x4, scoped, tag = 'scoped memory for tpu_custom_call.1']
    #allocation4 [shape = 's32[1]{0}', space=sflag, size = 0x4, scoped, tag = 'scoped memory for tpu_custom_call.1']
    #allocation5 [shape = 'u8[8192]{0}', space=vmem, size = 0x2000, scoped, tag = 'output window, operand 0, single buffered']
    %7 = vsyncpa [#allocation3], 0
    %8 = vsyncpa [#allocation4], 0
    // Predicated region
    $region2: #{tpu_custom_call.1} parent=1 // pred_check
      _
    $region3: #{tpu_custom_call.1} parent=1 // pred_check_branch
      %10 = sbr.rel (0) target = $region5
    $region4: #{tpu_custom_call.1} parent=1 // pred_region
      %s12 = ssub.s32 256, 256
      %13 = vsyncadd [#allocation3], %s12
      %s14 = sshll.u32 [#allocation2], 4
      %s15 = int_to_ptr.vmem [resolvable:$true] %s14
      %20 = dma.hbm_to_vmem [thread:$0]  %s0, 256, %s15, [#allocation3], 128, 128, 8
    $region5: #{tpu_custom_call.1} parent=1 // pred_fallthru
      _
    // Predicated region
    $region6: #{tpu_custom_call.1} parent=1 // pred_check
      _
    $region7: #{tpu_custom_call.1} parent=1 // pred_check_branch
      %22 = sbr.rel (0) target = $region9
    $region8: #{tpu_custom_call.1} parent=1 // pred_region
      _
    $region9: #{tpu_custom_call.1} parent=1 // pred_fallthru
      _
    // Predicated region
    $region10: #{tpu_custom_call.1} parent=1 // pred_check
      _
    $region11: #{tpu_custom_call.1} parent=1 // pred_check_branch
      %24 = sbr.rel (0) target = $region13
    $region12: #{tpu_custom_call.1} parent=1 // pred_region
      %25 = dma.done [#allocation3], 256
    $region13: #{tpu_custom_call.1} parent=1 // pred_fallthru
      _
    %v26 = vld [vmem:[#allocation2] sm:$0xff]
    %v27 = vld [vmem:[#allocation2 + $0x8] sm:$0xff]
    %v28 = vld [vmem:[%s1] sm:$0x3]
    %v31 = vunpack.c.l.s4 1966171168
    %v32 = vunpack.c.0.s8 %v31
    %v33 = vlaneseq
    %v34 = vshrl.u32 %v33, 7
    %v35 = vsub.s32 %v32, %v34
    %v36 = vrot.slane %v28, %v35
    %v37 = vcombine.high %v36, %v36
    %v39 = vunpack.c.l.s4 1966171168
    %v40 = vunpack.c.0.s8 %v39
    %v41 = vlaneseq
    %v42 = vshrl.u32 %v41, 7
    %v43 = vsub.s32 %v40, %v42
    %v44 = vrot.slane %v36, %v43
    %v46 = vunpack.c.l.s4 1966171168
    %v47 = vunpack.c.0.s8 %v46
    %v48 = vlaneseq
    %v49 = vshrl.u32 %v48, 7
    %v50 = vsub.s32 %v47, %v49
    %v51 = vrot.slane %v37, %v50
    %vm52 = vcmask 261120
    %v53 = vsel %vm52, %v26, 0.0
    %54 = vadd.xlane.f32.xlu0 %v53
    %v55 = vpop.xlane.xlu0 %54
    %v56 = vsel %vm52, %v27, 0.0
    %57 = vadd.xlane.f32.xlu0 %v56
    %v58 = vpop.xlane.xlu0 %57
    %v59 = vmul.f32 %v55, 0.03125
    %v60 = vmul.f32 %v58, 0.03125
    %v61 = vsub.f32 %v26, %v59
    %v62 = vsub.f32 %v27, %v60
    %v63 = vmul.f32 %v61, %v61
    %v64 = vmul.f32 %v62, %v62
    %v65 = vsel %vm52, %v63, 0.0
    %66 = vadd.xlane.f32.xlu0 %v65
    %v67 = vpop.xlane.xlu0 %66
    %v68 = vsel %vm52, %v64, 0.0
    %69 = vadd.xlane.f32.xlu0 %v68
    %v70 = vpop.xlane.xlu0 %69
    %v71 = vmul.f32 %v67, 0.03125
    %v72 = vmul.f32 %v70, 0.03125
    %v73 = vadd.f32 %v71, 1e-06
    %v74 = vadd.f32 %v72, 1e-06
    %v75 = vrsqrt.pop %v73
    %v76 = vrsqrt.pop %v74
    %v77 = vmul.f32 %v61, %v75
    %v78 = vmul.f32 %v62, %v76
    %v79 = vlaneseq
    %v80 = vshrl.u32 %v79, 7
    %v81 = vsub.s32 0, %v80
    %v82 = vrot.slane %v44, %v81
    %v83 = vlaneseq
    %v84 = vshrl.u32 %v83, 7
    %v85 = vsub.s32 0, %v84
    %v86 = vrot.slane %v51, %v85
    %v89 = vmul.f32 %v82, %v77
    %v90 = vmul.f32 %v86, %v78
    %91 = vrot.lane.b32.xlu0 %v82, 96
    %v92 = vpop.permute.xlu0 %91
    %93 = vrot.lane.b32.xlu0 %v86, 96
    %v94 = vpop.permute.xlu0 %93
    %v97 = vadd.f32 %v89, %v92
    %v98 = vadd.f32 %v90, %v94
    %99 = vst.msk [vmem:[#allocation5] sm:$0xff] %vm52, %v97
    %100 = vst.msk [vmem:[#allocation5 + $0x8] sm:$0xff] %vm52, %v98
    // Predicated region
    $region14: #{tpu_custom_call.1} parent=1 // pred_check
      _
    $region15: #{tpu_custom_call.1} parent=1 // pred_check_branch
      %102 = sbr.rel (0) target = $region17
    $region16: #{tpu_custom_call.1} parent=1 // pred_region
      %s104 = ssub.s32 256, 256
      %105 = vsyncadd [#allocation4], %s104
      %s106 = sshll.u32 [#allocation5], 4
      %s107 = int_to_ptr.vmem [resolvable:$true] %s106
      %112 = dma.vmem_to_hbm [thread:$0]  %s107, 256, %s2, [#allocation4], 128, 128, 8
    $region17: #{tpu_custom_call.1} parent=1 // pred_fallthru
      _
    // Predicated region
    $region18: #{tpu_custom_call.1} parent=1 // pred_check
      _
    $region19: #{tpu_custom_call.1} parent=1 // pred_check_branch
      %114 = sbr.rel (0) target = $region21
    $region20: #{tpu_custom_call.1} parent=1 // pred_region
      %115 = dma.done [#allocation4], 256
    $region21: #{tpu_custom_call.1} parent=1 // pred_fallthru
      _
    %116 = vsyncpa [#allocation3], 1
    %117 = vsyncpa [#allocation4], 1

</llo_original>
